<compile_context>
chip_gen: v7x
topology: tpu7x:2x2x1
jax: 0.10.0
libtpu: 0.0.40
codegen_flags: <defaults>
</compile_context>

<pallas_src>
import functools

import jax
import jax.numpy as jnp
from jax import lax
from jax.experimental import pallas as pl
from jax.experimental.pallas import tpu as pltpu


_NEG_BIG = -1e30  # finite "−inf" so exp/max never see NaN paths


def _round_up(x, m):
    return ((x + m - 1) // m) * m


def _pick_tiles_and_vmem():
    """Generation-aware tile targets + VMEM limit.

    128 MiB VMEM parts (v5e/v6e): tile_n=1024, tile_v=2048, ~100 MiB limit.
    64  MiB VMEM parts (v7x)    : tile_n=1024, tile_v=1024, ~56 MiB limit
    (keeps double-buffering of both streams alive).
    """
    try:
        vmem_cap = pltpu.get_tpu_info().vmem_capacity_bytes
    except Exception:  # pragma: no cover - conservative fallback
        vmem_cap = 64 * 1024 * 1024
    if vmem_cap >= 128 * 1024 * 1024:
        return 1024, 2048, 100 * 1024 * 1024
    return 1024, 1024, 56 * 1024 * 1024


def _ce_loss_kernel(h_ref, w_ref, tgt_ref, out_ref, m_ref, l_ref, t_ref,
                    *, n_valid, seq_len, vocab, tile_n, tile_v, mask_vocab):
    i = pl.program_id(0)          # row-tile index   (parallel)
    j = pl.program_id(1)          # vocab-tile index (reduction, innermost)

    @pl.when(j == 0)
    def _():
        m_ref[...] = jnp.full_like(m_ref, _NEG_BIG)
        l_ref[...] = jnp.zeros_like(l_ref)
        t_ref[...] = jnp.zeros_like(t_ref)

    # [tile_n, D] bf16 @ [D, tile_v] bf16 -> f32 on the MXU.
    logits = jnp.dot(h_ref[...], w_ref[...], preferred_element_type=jnp.float32)

    # Lane-only column ids for this vocab tile: (1, tile_v), broadcast later.
    col = lax.broadcasted_iota(jnp.int32, (1, tile_v), 1) + j * tile_v

    if mask_vocab:
        # Padded vocab columns exist only in the last vocab tile; the
        # (1, tile_v) bias is all-zero elsewhere, so this is a cheap
        # broadcast add rather than a full-tile compare+select.
        logits = logits + jnp.where(col < vocab, 0.0, _NEG_BIG)

    # Target logit: the matching column lives in exactly one vocab tile.
    # (Targets are always < vocab, so reading unmasked logits is safe.)
    tgt = tgt_ref[...]                                     # [tile_n, 1] int32
    t_ref[...] += jnp.sum(jnp.where(col == tgt, logits, 0.0),
                          axis=-1, keepdims=True)

    # Online logsumexp over vocab tiles (flash-softmax style).
    m_prev = m_ref[...]
    m_new = jnp.maximum(m_prev, jnp.max(logits, axis=-1, keepdims=True))
    l_ref[...] = (l_ref[...] * jnp.exp(m_prev - m_new)
                  + jnp.sum(jnp.exp(logits - m_new), axis=-1, keepdims=True))
    m_ref[...] = m_new

    @pl.when(j == pl.num_programs(1) - 1)
    def _():
        # Validity mask from the row index: drop padded rows and the last
        # position of each sequence (no target to predict).
        row = lax.broadcasted_iota(jnp.int32, (tile_n, 1), 0) + i * tile_n
        valid = jnp.logical_and(row < n_valid,
                                (row % seq_len) != (seq_len - 1))
        lse = m_ref[...] + jnp.log(l_ref[...])
        out_ref[...] = jnp.where(valid, lse - t_ref[...], 0.0)


def pallas_ce_per_row_loss(h, w, targets, *, n_valid, seq_len, vocab,
                           tile_n, tile_v, vmem_limit_bytes):
    """Per-row masked next-token CE.  h:[Np,D] bf16, w:[D,Vp] bf16,
    targets:[Np,1] int32  ->  [Np,1] f32 (0 for invalid rows)."""
    n_pad, d = h.shape
    v_pad = w.shape[1]
    assert n_pad % tile_n == 0 and v_pad % tile_v == 0
    num_i = n_pad // tile_n
    num_j = v_pad // tile_v

    kernel = functools.partial(
        _ce_loss_kernel, n_valid=n_valid, seq_len=seq_len, vocab=vocab,
        tile_n=tile_n, tile_v=tile_v, mask_vocab=(v_pad != vocab))

    return pl.pallas_call(
        kernel,
        out_shape=jax.ShapeDtypeStruct((n_pad, 1), jnp.float32),
        grid_spec=pltpu.PrefetchScalarGridSpec(
            num_scalar_prefetch=0,
            grid=(num_i, num_j),
            in_specs=[
                pl.BlockSpec((tile_n, d), lambda i, j: (i, 0)),      # hidden
                # If profiling still shows exposed W DMA, add
                # pipeline_mode=pl.Buffered(3) to this spec only.
                pl.BlockSpec((d, tile_v), lambda i, j: (0, j)),      # weights
                pl.BlockSpec((tile_n, 1), lambda i, j: (i, 0)),      # targets
            ],
            out_specs=pl.BlockSpec((tile_n, 1), lambda i, j: (i, 0)),
            scratch_shapes=[
                pltpu.VMEM((tile_n, 1), jnp.float32),   # running max m
                pltpu.VMEM((tile_n, 1), jnp.float32),   # running sum l
                pltpu.VMEM((tile_n, 1), jnp.float32),   # target logit
            ],
        ),
        compiler_params=pltpu.CompilerParams(
            # row tiles independent (megacore sharding); vocab is the reduction.
            dimension_semantics=("parallel", "arbitrary"),
            vmem_limit_bytes=vmem_limit_bytes,
        ),
    )(h, w, targets)


def calculate_loss(tokens, embed, w_out, *, tile_n=None, tile_v=None):
    """Next-token cross-entropy, mean over the B*(T-1) valid positions."""
    b, t = tokens.shape
    v, d = embed.shape
    n = b * t

    tn_auto, tv_auto, vmem_limit = _pick_tiles_and_vmem()
    tile_n = tile_n or tn_auto
    tile_v = tile_v or tv_auto
    # Clamp to the problem size while keeping layout-friendly multiples.
    tile_n = min(tile_n, _round_up(n, 16))
    tile_v = min(tile_v, _round_up(v, 128))

    n_pad = _round_up(n, tile_n)
    v_pad = _round_up(v, tile_v)

    # Cast the table to bf16 BEFORE the gather: the gathered [N, D] hidden
    # stream is written/read once at 2 B/elem instead of 4.
    # TODO(synk): fuse the embedding gather into the kernel via scalar-
    # prefetched token ids + an Element row-gather index_map to remove the
    # [N, D] HBM round trip entirely.
    hidden = embed.astype(jnp.bfloat16)[tokens]                   # [B, T, D]

    # Position p predicts token p+1; the last position has no target.
    targets = jnp.concatenate(
        [tokens[:, 1:], jnp.zeros((b, 1), jnp.int32)], axis=1)    # [B, T]

    h = hidden.reshape(n, d)
    if n_pad != n:
        h = jnp.pad(h, ((0, n_pad - n), (0, 0)))
    w = w_out.astype(jnp.bfloat16)
    if v_pad != v:
        w = jnp.pad(w, ((0, 0), (0, v_pad - v)))
    tgt = targets.reshape(n, 1)
    if n_pad != n:
        tgt = jnp.pad(tgt, ((0, n_pad - n), (0, 0)))

    per_row = pallas_ce_per_row_loss(
        h, w, tgt, n_valid=n, seq_len=t, vocab=v,
        tile_n=tile_n, tile_v=tile_v,
        vmem_limit_bytes=vmem_limit)                              # [n_pad, 1]

    count = jnp.float32(b * (t - 1))
    return jnp.sum(per_row) / count


if __name__ == "__main__":
    # Small, deterministic shapes.
    B, T, D, V = 2, 8, 32, 128
    key = jax.random.PRNGKey(0)
    k_tok, k_emb, k_w = jax.random.split(key, 3)

    tokens = jax.random.randint(k_tok, (B, T), 0, V, dtype=jnp.int32)
    embed = jax.random.normal(k_emb, (V, D), jnp.float32) * 0.02
    w_out = jax.random.normal(k_w, (D, V), jnp.float32) * 0.02

    loss = jax.jit(calculate_loss)(tokens, embed, w_out)
    loss = jax.block_until_ready(loss)

    # Pure-JAX reference of the same (bf16-input, f32-accumulate) math.
    hidden = embed.astype(jnp.bfloat16)[tokens].reshape(B * T, D)
    logits = jnp.dot(hidden, w_out.astype(jnp.bfloat16),
                     preferred_element_type=jnp.float32)
    tgt = jnp.concatenate([tokens[:, 1:], jnp.zeros((B, 1), jnp.int32)],
                          axis=1).reshape(-1)
    msk = jnp.concatenate([jnp.ones((B, T - 1)), jnp.zeros((B, 1))],
                          axis=1).reshape(-1)
    lse = jax.nn.logsumexp(logits, axis=-1)
    ref = jnp.sum((lse - logits[jnp.arange(B * T), tgt]) * msk) / jnp.sum(msk)
    assert jnp.allclose(loss, ref, rtol=1e-4, atol=1e-4), (loss, ref)

    print("KERNEL_OK")
</pallas_src>

<mosaic_0001>
module attributes {stable_mosaic.version = 11 : i64} {
  func.func @_ce_loss_kernel(%arg0: i32, %arg1: i32, %arg2: memref<16x32xbf16, #tpu.memory_space<vmem>>, %arg3: memref<32x128xbf16, #tpu.memory_space<vmem>>, %arg4: memref<16x1xi32, #tpu.memory_space<vmem>>, %arg5: memref<16x1xf32, #tpu.memory_space<vmem>>, %arg6: memref<16x1xf32, #tpu.memory_space<vmem>>, %arg7: memref<16x1xf32, #tpu.memory_space<vmem>>, %arg8: memref<16x1xf32, #tpu.memory_space<vmem>>) attributes {dimension_semantics = [#tpu.dimension_semantics<parallel>, #tpu.dimension_semantics<arbitrary>], iteration_bounds = array<i64: 1, 1>, scalar_prefetch = 0 : i64, scratch_operands = 3 : i64, tpu.core_type = #tpu.core_type<tc>, window_params = [{transform_indices = @transform_0, window_bounds = array<i64: 16, 32>}, {transform_indices = @transform_1, window_bounds = array<i64: 32, 128>}, {transform_indices = @transform_2, window_bounds = array<i64: 16, 1>}, {transform_indices = @transform_3, window_bounds = array<i64: 16, 1>}]} {
    %c0_i32 = arith.constant 0 : i32
    %0 = arith.cmpi eq, %arg1, %c0_i32 : i32
    %1 = arith.extui %0 : i1 to i32
    %c0_i32_0 = arith.constant 0 : i32
    %2 = arith.cmpi ne, %1, %c0_i32_0 : i32
    scf.if %2 {
      %cst_24 = arith.constant -1.000000e+30 : f32
      %40 = vector.broadcast %cst_24 : f32 to vector<16x1xf32>
      %c0_25 = arith.constant 0 : index
      %c0_26 = arith.constant 0 : index
      %41 = vector.load %arg6[%c0_25, %c0_26] : memref<16x1xf32, #tpu.memory_space<vmem>>, vector<16x1xf32>
      tpu.vector_store %arg6[%c0_25, %c0_26], %40 {strides = array<i32>} : memref<16x1xf32, #tpu.memory_space<vmem>>, vector<16x1xf32>,
      %cst_27 = arith.constant 0.000000e+00 : f32
      %42 = vector.broadcast %cst_27 : f32 to vector<16x1xf32>
      %c0_28 = arith.constant 0 : index
      %c0_29 = arith.constant 0 : index
      %43 = vector.load %arg7[%c0_28, %c0_29] : memref<16x1xf32, #tpu.memory_space<vmem>>, vector<16x1xf32>
      tpu.vector_store %arg7[%c0_28, %c0_29], %42 {strides = array<i32>} : memref<16x1xf32, #tpu.memory_space<vmem>>, vector<16x1xf32>,
      %cst_30 = arith.constant 0.000000e+00 : f32
      %44 = vector.broadcast %cst_30 : f32 to vector<16x1xf32>
      %c0_31 = arith.constant 0 : index
      %c0_32 = arith.constant 0 : index
      %45 = vector.load %arg8[%c0_31, %c0_32] : memref<16x1xf32, #tpu.memory_space<vmem>>, vector<16x1xf32>
      tpu.vector_store %arg8[%c0_31, %c0_32], %44 {strides = array<i32>} : memref<16x1xf32, #tpu.memory_space<vmem>>, vector<16x1xf32>,
    } else {
    }
    %c0 = arith.constant 0 : index
    %c0_1 = arith.constant 0 : index
    %3 = vector.load %arg2[%c0, %c0_1] : memref<16x32xbf16, #tpu.memory_space<vmem>>, vector<16x32xbf16>
    %c0_2 = arith.constant 0 : index
    %c0_3 = arith.constant 0 : index
    %4 = vector.load %arg3[%c0_2, %c0_3] : memref<32x128xbf16, #tpu.memory_space<vmem>>, vector<32x128xbf16>
    %cst = arith.constant dense<0.000000e+00> : vector<16x128xf32>
    %5 = tpu.matmul %3, %4, %cst {dimension_numbers = #tpu.dot_dimension_numbers<[1], [0], [0], [1], [0, 0, 1, 1], [], []>} : vector<16x32xbf16>, vector<32x128xbf16>, vector<16x128xf32> -> vector<16x128xf32>
    %6 = tpu.iota {dimensions = array<i32: 1>} : vector<1x128xi32>
    %c128_i32 = arith.constant 128 : i32
    %7 = arith.muli %arg1, %c128_i32 : i32
    %8 = vector.broadcast %7 : i32 to vector<1x128xi32>
    %9 = arith.addi %6, %8 : vector<1x128xi32>
    %c0_4 = arith.constant 0 : index
    %c0_5 = arith.constant 0 : index
    %10 = vector.load %arg4[%c0_4, %c0_5] : memref<16x1xi32, #tpu.memory_space<vmem>>, vector<16x1xi32>
    %c0_6 = arith.constant 0 : index
    %c0_7 = arith.constant 0 : index
    %11 = vector.load %arg8[%c0_6, %c0_7] : memref<16x1xf32, #tpu.memory_space<vmem>>, vector<16x1xf32>
    %12 = vector.broadcast %9 : vector<1x128xi32> to vector<16x128xi32>
    %13 = vector.broadcast %10 : vector<16x1xi32> to vector<16x128xi32>
    %14 = arith.cmpi eq, %12, %13 : vector<16x128xi32>
    %cst_8 = arith.constant 0.000000e+00 : f32
    %15 = vector.broadcast %cst_8 : f32 to vector<16x128xf32>
    %16 = arith.select %14, %5, %15 : vector<16x128xi1>, vector<16x128xf32>
    %cst_9 = arith.constant dense<0.000000e+00> : vector<16xf32>
    %17 = vector.multi_reduction <add>, %16, %cst_9 [1] : vector<16x128xf32> to vector<16xf32>
    %18 = vector.shape_cast %17 : vector<16xf32> to vector<16x1xf32>
    %19 = arith.addf %11, %18 : vector<16x1xf32>
    %c0_10 = arith.constant 0 : index
    %c0_11 = arith.constant 0 : index
    %20 = vector.load %arg8[%c0_10, %c0_11] : memref<16x1xf32, #tpu.memory_space<vmem>>, vector<16x1xf32>
    tpu.vector_store %arg8[%c0_10, %c0_11], %19 {strides = array<i32>} : memref<16x1xf32, #tpu.memory_space<vmem>>, vector<16x1xf32>,
    %c0_12 = arith.constant 0 : index
    %c0_13 = arith.constant 0 : index
    %21 = vector.load %arg6[%c0_12, %c0_13] : memref<16x1xf32, #tpu.memory_space<vmem>>, vector<16x1xf32>
    %cst_14 = arith.constant dense<0xFF800000> : vector<16xf32>
    %22 = vector.multi_reduction <maximumf>, %5, %cst_14 [1] : vector<16x128xf32> to vector<16xf32>
    %23 = vector.shape_cast %22 : vector<16xf32> to vector<16x1xf32>
    %24 = arith.maximumf %21, %23 : vector<16x1xf32>
    %c0_15 = arith.constant 0 : index
    %c0_16 = arith.constant 0 : index
    %25 = vector.load %arg7[%c0_15, %c0_16] : memref<16x1xf32, #tpu.memory_space<vmem>>, vector<16x1xf32>
    %26 = arith.subf %21, %24 : vector<16x1xf32>
    %27 = math.exp %26 : vector<16x1xf32>
    %28 = arith.mulf %25, %27 : vector<16x1xf32>
    %29 = vector.broadcast %24 : vector<16x1xf32> to vector<16x128xf32>
    %30 = arith.subf %5, %29 : vector<16x128xf32>
    %31 = math.exp %30 : vector<16x128xf32>
    %cst_17 = arith.constant dense<0.000000e+00> : vector<16xf32>
    %32 = vector.multi_reduction <add>, %31, %cst_17 [1] : vector<16x128xf32> to vector<16xf32>
    %33 = vector.shape_cast %32 : vector<16xf32> to vector<16x1xf32>
    %34 = arith.addf %28, %33 : vector<16x1xf32>
    %c0_18 = arith.constant 0 : index
    %c0_19 = arith.constant 0 : index
    %35 = vector.load %arg7[%c0_18, %c0_19] : memref<16x1xf32, #tpu.memory_space<vmem>>, vector<16x1xf32>
    tpu.vector_store %arg7[%c0_18, %c0_19], %34 {strides = array<i32>} : memref<16x1xf32, #tpu.memory_space<vmem>>, vector<16x1xf32>,
    %c0_20 = arith.constant 0 : index
    %c0_21 = arith.constant 0 : index
    %36 = vector.load %arg6[%c0_20, %c0_21] : memref<16x1xf32, #tpu.memory_space<vmem>>, vector<16x1xf32>
    tpu.vector_store %arg6[%c0_20, %c0_21], %24 {strides = array<i32>} : memref<16x1xf32, #tpu.memory_space<vmem>>, vector<16x1xf32>,
    %c0_i32_22 = arith.constant 0 : i32
    %37 = arith.cmpi eq, %arg1, %c0_i32_22 : i32
    %38 = arith.extui %37 : i1 to i32
    %c0_i32_23 = arith.constant 0 : i32
    %39 = arith.cmpi ne, %38, %c0_i32_23 : i32
    scf.if %39 {
      %40 = tpu.iota {dimensions = array<i32: 0>} : vector<16x1xi32>
      %c16_i32 = arith.constant 16 : i32
      %41 = arith.muli %arg0, %c16_i32 : i32
      %42 = vector.broadcast %41 : i32 to vector<16x1xi32>
      %43 = arith.addi %40, %42 : vector<16x1xi32>
      %c16_i32_24 = arith.constant 16 : i32
      %44 = vector.broadcast %c16_i32_24 : i32 to vector<16x1xi32>
      %45 = arith.cmpi slt, %43, %44 : vector<16x1xi32>
      %c8_i32 = arith.constant 8 : i32
      %c0_i32_25 = arith.constant 0 : i32
      %46 = arith.cmpi eq, %c8_i32, %c0_i32_25 : i32
      %c1_i32 = arith.constant 1 : i32
      %47 = arith.select %46, %c1_i32, %c8_i32 : i32
      %48 = vector.broadcast %47 : i32 to vector<16x1xi32>
      %49 = arith.remsi %43, %48 : vector<16x1xi32>
      %c0_i32_26 = arith.constant 0 : i32
      %50 = vector.broadcast %c0_i32_26 : i32 to vector<16x1xi32>
      %51 = arith.cmpi ne, %49, %50 : vector<16x1xi32>
      %c0_i32_27 = arith.constant 0 : i32
      %52 = vector.broadcast %c0_i32_27 : i32 to vector<16x1xi32>
      %53 = arith.cmpi slt, %49, %52 : vector<16x1xi32>
      %c0_i32_28 = arith.constant 0 : i32
      %54 = arith.cmpi slt, %47, %c0_i32_28 : i32
      %55 = vector.broadcast %54 : i1 to vector<16x1xi1>
      %56 = vector.broadcast %55 : vector<16x1xi1> to vector<16x1xi1>
      %57 = arith.xori %53, %56 : vector<16x1xi1>
      %58 = arith.andi %57, %51 : vector<16x1xi1>
      %59 = vector.broadcast %47 : i32 to vector<16x1xi32>
      %60 = arith.addi %49, %59 : vector<16x1xi32>
      %61 = arith.select %58, %60, %49 : vector<16x1xi1>, vector<16x1xi32>
      %c7_i32 = arith.constant 7 : i32
      %62 = vector.broadcast %c7_i32 : i32 to vector<16x1xi32>
      %63 = arith.cmpi ne, %61, %62 : vector<16x1xi32>
      %64 = arith.andi %45, %63 : vector<16x1xi1>
      %c0_29 = arith.constant 0 : index
      %c0_30 = arith.constant 0 : index
      %65 = vector.load %arg6[%c0_29, %c0_30] : memref<16x1xf32, #tpu.memory_space<vmem>>, vector<16x1xf32>
      %c0_31 = arith.constant 0 : index
      %c0_32 = arith.constant 0 : index
      %66 = vector.load %arg7[%c0_31, %c0_32] : memref<16x1xf32, #tpu.memory_space<vmem>>, vector<16x1xf32>
      %67 = math.log %66 : vector<16x1xf32>
      %68 = arith.addf %65, %67 : vector<16x1xf32>
      %c0_33 = arith.constant 0 : index
      %c0_34 = arith.constant 0 : index
      %69 = vector.load %arg8[%c0_33, %c0_34] : memref<16x1xf32, #tpu.memory_space<vmem>>, vector<16x1xf32>
      %70 = arith.subf %68, %69 : vector<16x1xf32>
      %cst_35 = arith.constant 0.000000e+00 : f32
      %71 = vector.broadcast %cst_35 : f32 to vector<16x1xf32>
      %72 = arith.select %64, %70, %71 : vector<16x1xi1>, vector<16x1xf32>
      %c0_36 = arith.constant 0 : index
      %c0_37 = arith.constant 0 : index
      %73 = vector.load %arg5[%c0_36, %c0_37] : memref<16x1xf32, #tpu.memory_space<vmem>>, vector<16x1xf32>
      tpu.vector_store %arg5[%c0_36, %c0_37], %72 {strides = array<i32>} : memref<16x1xf32, #tpu.memory_space<vmem>>, vector<16x1xf32>,
    } else {
    }
    return
  }
  func.func @transform_0(%arg0: i32, %arg1: i32) -> (i32, i32) {
    %c0_i32 = arith.constant 0 : i32
    %c0_i32_0 = arith.constant 0 : i32
    return %arg0, %c0_i32 : i32, i32
  }
  func.func @transform_1(%arg0: i32, %arg1: i32) -> (i32, i32) {
    %c0_i32 = arith.constant 0 : i32
    %c0_i32_0 = arith.constant 0 : i32
    return %c0_i32, %arg1 : i32, i32
  }
  func.func @transform_2(%arg0: i32, %arg1: i32) -> (i32, i32) {
    %c0_i32 = arith.constant 0 : i32
    %c0_i32_0 = arith.constant 0 : i32
    return %arg0, %c0_i32 : i32, i32
  }
  func.func @transform_3(%arg0: i32, %arg1: i32) -> (i32, i32) {
    %c0_i32 = arith.constant 0 : i32
    %c0_i32_0 = arith.constant 0 : i32
    return %arg0, %c0_i32 : i32, i32
  }
}

</mosaic_0001>

<llo_original>
// kernel: calculate_loss.1
$region0: #{calculate_loss.1}
  #allocation0 [shape = 'u32[]', space=smem, size = 0x4, offset = 0x4, fixed_abs, tag = 'smem constant byte address 0x4 - core index']
  #allocation1 [shape = 'u32[144,128]{1,0:T(1,128)}', space=vmem, size = 0x12000, scoped, tag = 'internal scratch']
  #allocation2 [shape = 'f32[16,1]{1,0:T(8,128)}', space=vmem, size = 0x2000, scoped, tag = 'scratch operand']
  #allocation3 [shape = 'f32[16,1]{1,0:T(8,128)}', space=vmem, size = 0x2000, scoped, tag = 'scratch operand']
  #allocation4 [shape = 'f32[16,1]{1,0:T(8,128)}', space=vmem, size = 0x2000, scoped, tag = 'scratch operand']
  %s0 = inlined_call_operand.vmem [shape: bf16[16,32], index: 0, kind: input, shape index: {}]
  %s1 = inlined_call_operand.vmem [shape: bf16[32,128], index: 1, kind: input, shape index: {}]
  %s2 = inlined_call_operand.vmem [shape: s32[16,1], index: 2, kind: input, shape index: {}]
  %s3 = inlined_call_operand.vmem [shape: f32[16,1], index: 3, kind: output, shape index: {}]
  %s4 = sld [smem:[#allocation0]]
  $region30: #{calculate_loss.1} parent=0
    _
  %s6 = ssub.s32 1, %s4
  %s7 = scalar_select 0, %s6, %s4
  // Predicated region
  $region2: #{calculate_loss.1} parent=0 // pred_check
    _
  $region3: #{calculate_loss.1} parent=0 // pred_check_branch
    %9 = sbr.rel (0) target = $region5
  $region4: #{calculate_loss.1} parent=0 // pred_region
    _
  $region5: #{calculate_loss.1} parent=0 // pred_fallthru
    _
  // Predicated region
  $region6: #{calculate_loss.1} parent=0 // pred_check
    _
  $region7: #{calculate_loss.1} parent=0 // pred_check_branch
    %11 = sbr.rel (0) target = $region9
  $region8: #{calculate_loss.1} parent=0 // pred_region
    _
  $region9: #{calculate_loss.1} parent=0 // pred_fallthru
    _
  // Predicated region
  $region10: #{calculate_loss.1} parent=0 // pred_check
    _
  $region11: #{calculate_loss.1} parent=0 // pred_check_branch
    %13 = sbr.rel (0) target = $region13
  $region12: #{calculate_loss.1} parent=0 // pred_region
    _
  $region13: #{calculate_loss.1} parent=0 // pred_fallthru
    _
  %p15 = scmp.eq.s32.totalorder 0, 0
  // Predicated region
  $region14: #{calculate_loss.1} parent=0 // pred_check
    %p16 = pneg %p15
  $region15: #{calculate_loss.1} parent=0 // pred_check_branch
    %18 = sbr.rel (%p16) target = $region17
  $region16: #{calculate_loss.1} parent=0 // pred_region
    %vm19 = vcmask 7168
    %20 = vst.msk [vmem:[#allocation2] sm:$0xff] %vm19, -1e+30
    %21 = vst.msk [vmem:[#allocation2 + $0x8] sm:$0xff] %vm19, -1e+30
    %22 = vst.msk [vmem:[#allocation3] sm:$0xff] %vm19, 0.0
    %23 = vst.msk [vmem:[#allocation3 + $0x8] sm:$0xff] %vm19, 0.0
    %24 = vst.msk [vmem:[#allocation4] sm:$0xff] %vm19, 0.0
    %25 = vst.msk [vmem:[#allocation4 + $0x8] sm:$0xff] %vm19, 0.0
  $region17: #{calculate_loss.1} parent=0 // pred_fallthru
    _
  %v26 = vld [vmem:[%s0] sm:$0xf]
  %v27 = vld [vmem:[%s0 + $0x4] sm:$0xf]
  %v28 = vld [vmem:[%s1] sm:$0xf]
  %v29 = vld [vmem:[%s1 + $0x4] sm:$0xf]
  %v30 = vld [vmem:[%s1 + $0x8] sm:$0xf]
  %v31 = vld [vmem:[%s1 + $0xc] sm:$0xf]
  %v34 = vunpack.c.l.b16 %v26
  %v35 = vunpack.c.l.b16 %v27
  %v36 = vpack.c.b16 %v35, %v34
  %v41 = vunpack.c.l.b16 %v28
  %v42 = vunpack.c.l.b16 %v29
  %v43 = vunpack.c.l.b16 %v30
  %v44 = vunpack.c.l.b16 %v31
  %v45 = vpack.c.b16 %v42, %v41
  %v46 = vpack.c.b16 %v44, %v43
  %vm49 = vcmask 261120
  %v51 = vsel %vm49, %v36, 0
  %53 = vmatprep.subr.bf16.mxu0 0
  %54 = vmatpush1.bf16.msra.mxu0 %v45
  %55 = vmatprep.subr.bf16.mxu0 0
  %56 = vmatpush1.bf16.msra.mxu0 %v46
  %57 = vmatprep.subr.bf16.mxu0 0
  %58 = vmatpush1.bf16.msra.mxu0 0
  %59 = vmatprep.subr.bf16.mxu0 0
  %60 = vmatpush1.bf16.msra.mxu0 0
  %61 = vmatprep.subr.bf16.mxu0 0
  %62 = vmatpush1.bf16.msra.mxu0 0
  %63 = vmatprep.subr.bf16.mxu0 0
  %64 = vmatpush1.bf16.msra.mxu0 0
  %65 = vmatprep.subr.bf16.mxu0 0
  %66 = vmatpush1.bf16.msra.mxu0 0
  %67 = vmatprep.subr.bf16.mxu0 0
  %68 = vmatpush1.bf16.msra.mxu0 0
  %69 = vmatprep.subr.bf16.mxu0 0
  %70 = vmatpush1.bf16.msra.mxu0 0
  %71 = vmatprep.subr.bf16.mxu0 0
  %72 = vmatpush1.bf16.msra.mxu0 0
  %73 = vmatprep.subr.bf16.mxu0 0
  %74 = vmatpush1.bf16.msra.mxu0 0
  %75 = vmatprep.subr.bf16.mxu0 0
  %76 = vmatpush1.bf16.msra.mxu0 0
  %77 = vmatprep.subr.bf16.mxu0 0
  %78 = vmatpush1.bf16.msra.mxu0 0
  %79 = vmatprep.subr.bf16.mxu0 0
  %80 = vmatpush1.bf16.msra.mxu0 0
  %81 = vmatprep.subr.bf16.mxu0 0
  %82 = vmatpush1.bf16.msra.mxu0 0
  %83 = vmatprep.subr.bf16.mxu0 0
  %84 = vmatpush1.bf16.msra.mxu0 0
  %85 = vmatprep.mubr.bf16.mxu0 0
  %86 = vmatmul.mubr.bf16.gmra.mrb[0].mxu0 %v51
  %v87 = vpop.f32.mrb[0].mxu0
  %v88 = vadd.f32 0.0, %v87
  %v89 = vpop.f32.mrb[0].mxu0
  %v90 = vpop.f32.mrb[0].mxu0
  %v91 = vadd.f32 0.0, %v90
  %v92 = vpop.f32.mrb[0].mxu0
  %93 = vdwg.mxu0
  %v94 = vlaneseq
  %v95 = vand.u32 %v94, 127
  %s96 = smul.u32 0, 128
  %v97 = vstv %s96
  %v98 = vadd.s32 %v95, %v97
  %v99 = vld [vmem:[%s2] sm:$0xff]
  %v100 = vld [vmem:[%s2 + $0x8] sm:$0xff]
  %v101 = vld [vmem:[#allocation4] sm:$0xff]
  %v102 = vld [vmem:[#allocation4 + $0x8] sm:$0xff]
  %103 = vset.pattern.permute.xlu0 0
  %104 = vperm.xlu0 %103, %v99
  %v105 = vpop.permute.xlu0 %104
  %106 = vset.pattern.permute.xlu0 0
  %107 = vperm.xlu0 %106, %v100
  %v108 = vpop.permute.xlu0 %107
  %vm109 = vcmp.eq.s32.totalorder %v98, %v105
  %vm110 = vcmp.eq.s32.totalorder %v98, %v108
  %v111 = vsel %vm109, %v88, 0.0
  %v112 = vsel %vm110, %v91, 0.0
  %113 = vadd.xlane.f32.xlu0 %v111
  %v114 = vpop.xlane.xlu0 %113
  %115 = vadd.xlane.f32.xlu0 %v112
  %v116 = vpop.xlane.xlu0 %115
  %v117 = vadd.f32 %v101, %v114
  %v118 = vadd.f32 %v102, %v116
  %vm119 = vcmask 7168
  %120 = vst.msk [vmem:[#allocation4] sm:$0xff] %vm119, %v117
  %121 = vst.msk [vmem:[#allocation4 + $0x8] sm:$0xff] %vm119, %v118
  %v122 = vld [vmem:[#allocation2] sm:$0xff]
  %v123 = vld [vmem:[#allocation2 + $0x8] sm:$0xff]
  %124 = vmax.xlane.f32.xlu0 %v88
  %v125 = vpop.xlane.xlu0 %124
  %126 = vmax.xlane.f32.xlu0 %v91
  %v127 = vpop.xlane.xlu0 %126
  %v128 = vmax.f32 %v122, %v125
  %v129 = vmax.f32 %v123, %v127
  %v130 = vld [vmem:[#allocation3] sm:$0xff]
  %v131 = vld [vmem:[#allocation3 + $0x8] sm:$0xff]
  %v132 = vsub.f32 %v122, %v128
  %v133 = vsub.f32 %v123, %v129
  %v134 = vmul.f32 %v132, 1.442695
  %v135 = vpow.pop %v134
  %v136 = vmul.f32 %v133, 1.442695
  %v137 = vpow.pop %v136
  %v138 = vmul.f32 %v130, %v135
  %v139 = vmul.f32 %v131, %v137
  %141 = vset.pattern.permute.xlu0 0
  %142 = vperm.xlu0 %141, %v128
  %v143 = vpop.permute.xlu0 %142
  %146 = vset.pattern.permute.xlu0 0
  %147 = vperm.xlu0 %146, %v129
  %v148 = vpop.permute.xlu0 %147
  %v150 = vsub.f32 %v88, %v143
  %v151 = vsub.f32 %v91, %v148
  %v152 = vmul.f32 %v150, 1.442695
  %v153 = vpow.pop %v152
  %v154 = vmul.f32 %v151, 1.442695
  %v155 = vpow.pop %v154
  %156 = vadd.xlane.f32.xlu0 %v153
  %v157 = vpop.xlane.xlu0 %156
  %158 = vadd.xlane.f32.xlu0 %v155
  %v159 = vpop.xlane.xlu0 %158
  %v160 = vadd.f32 %v138, %v157
  %v161 = vadd.f32 %v139, %v159
  %162 = vst.msk [vmem:[#allocation3] sm:$0xff] %vm119, %v160
  %163 = vst.msk [vmem:[#allocation3 + $0x8] sm:$0xff] %vm119, %v161
  %164 = vst.msk [vmem:[#allocation2] sm:$0xff] %vm119, %v128
  %165 = vst.msk [vmem:[#allocation2 + $0x8] sm:$0xff] %vm119, %v129
  // Predicated region
  $region18: #{calculate_loss.1} parent=0 // pred_check
    %p166 = pneg %p15
  $region19: #{calculate_loss.1} parent=0 // pred_check_branch
    %168 = sbr.rel (%p166) target = $region21
  $region20: #{calculate_loss.1} parent=0 // pred_region
    %v169 = vlaneseq
    %v170 = vshrl.u32 %v169, 7
    %v171 = vadd.s32 %v170, 8
    %s172 = smul.u32 0, 16
    %v173 = vstv %s172
    %v174 = vadd.s32 %v170, %v173
    %v175 = vadd.s32 %v171, %v173
    %vm176 = vcmp.lt.s32.totalorder %v174, 16
    %vm177 = vcmp.lt.s32.totalorder %v175, 16
    %vm178 = vcmp.lt.s32.totalorder %v174, 0
    %v179 = vsub.s32 0, %v174
    %v180 = vsel %vm178, %v179, %v174
    %v181 = vshrl.u32 %v180, 3
    %v182 = vand.u32 %v180, 7
    %v183 = vsub.s32 0, %v182
    %v184 = vsel %vm178, %v183, %v182
    %vm185 = vcmp.lt.s32.totalorder %v175, 0
    %v186 = vsub.s32 0, %v175
    %v187 = vsel %vm185, %v186, %v175
    %v188 = vshrl.u32 %v187, 3
    %v189 = vand.u32 %v187, 7
    %v190 = vsub.s32 0, %v189
    %v191 = vsel %vm185, %v190, %v189
    %vm192 = vcmp.ne.s32.totalorder %v184, 0
    %vm193 = vcmp.ne.s32.totalorder %v191, 0
    %vm194 = vcmp.lt.s32.totalorder %v184, 0
    %vm195 = vcmp.lt.s32.totalorder %v191, 0
    %vm196 = vmand %vm194, %vm192
    %vm197 = vmand %vm195, %vm193
    %v198 = vadd.s32 %v184, 8
    %v199 = vadd.s32 %v191, 8
    %v200 = vsel %vm196, %v198, %v184
    %v201 = vsel %vm197, %v199, %v191
    %vm202 = vcmp.ne.s32.totalorder %v200, 7
    %vm203 = vcmp.ne.s32.totalorder %v201, 7
    %vm204 = vmand %vm176, %vm202
    %vm205 = vmand %vm177, %vm203
    %v206 = vld [vmem:[#allocation2] sm:$0xff]
    %v207 = vld [vmem:[#allocation2 + $0x8] sm:$0xff]
    %v208 = vld [vmem:[#allocation3] sm:$0xff]
    %v209 = vld [vmem:[#allocation3 + $0x8] sm:$0xff]
    %v210 = vlog2.pop %v208
    %v211 = vmul.f32 %v210, 0.6931472
    %v212 = vlog2.pop %v209
    %v213 = vmul.f32 %v212, 0.6931472
    %v214 = vadd.f32 %v206, %v211
    %v215 = vadd.f32 %v207, %v213
    %v216 = vld [vmem:[#allocation4] sm:$0xff]
    %v217 = vld [vmem:[#allocation4 + $0x8] sm:$0xff]
    %v218 = vsub.f32 %v214, %v216
    %v219 = vsub.f32 %v215, %v217
    %v220 = vsel %vm204, %v218, 0.0
    %v221 = vsel %vm205, %v219, 0.0
    %222 = vst.msk [vmem:[%s3] sm:$0xff] %vm119, %v220
    %223 = vst.msk [vmem:[%s3 + $0x8] sm:$0xff] %vm119, %v221
  $region21: #{calculate_loss.1} parent=0 // pred_fallthru
    _
  // Predicated region
  $region22: #{calculate_loss.1} parent=0 // pred_check
    _
  $region23: #{calculate_loss.1} parent=0 // pred_check_branch
    %225 = sbr.rel (0) target = $region25
  $region24: #{calculate_loss.1} parent=0 // pred_region
    _
  $region25: #{calculate_loss.1} parent=0 // pred_fallthru
    _
  // Predicated region
  $region26: #{calculate_loss.1} parent=0 // pred_check
    _
  $region27: #{calculate_loss.1} parent=0 // pred_check_branch
    %227 = sbr.rel (0) target = $region29
  $region28: #{calculate_loss.1} parent=0 // pred_region
    _
  $region29: #{calculate_loss.1} parent=0 // pred_fallthru
    _

</llo_original>
